<compile_context>
chip_gen: v5e
topology: v5e:2x2
jax: 0.10.0
libtpu: 0.0.40
codegen_flags: <defaults>
</compile_context>

<pallas_src>
import jax
import jax.numpy as jnp
from jax.experimental import pallas as pl
from jax.experimental.pallas import tpu as pltpu


def _round_up(x, m):
    return ((x + m - 1) // m) * m


def _vmem_capacity_bytes():
    try:
        return int(pltpu.get_tpu_info().vmem_capacity_bytes)
    except Exception:
        return 64 * 1024 * 1024  # conservative (v7x per-TC VMEM)


def _mlp_kernel(x_ref, w1_ref, b1_ref, w2_ref, b2_ref, w3_ref, b3_ref, o_ref):
    # x arrives f32; cast to bf16 in-kernel (VPU cast is free under a memory-bound regime).
    # All matmuls accumulate in f32 (preferred_element_type); bias add + ReLU stay f32.
    x = x_ref[...].astype(jnp.bfloat16)

    h1 = jnp.dot(x, w1_ref[...], preferred_element_type=jnp.float32)
    h1 = jnp.maximum(h1 + b1_ref[...], 0.0).astype(jnp.bfloat16)

    h2 = jnp.dot(h1, w2_ref[...], preferred_element_type=jnp.float32)
    h2 = jnp.maximum(h2 + b2_ref[...], 0.0).astype(jnp.bfloat16)

    h3 = jnp.dot(h2, w3_ref[...], preferred_element_type=jnp.float32)
    h3 = jnp.maximum(h3 + b3_ref[...], 0.0)

    o_ref[...] = h3.astype(o_ref.dtype)   # unpadded (tb, enc_dim) write


def prepare_params(params):
    """One-time preprocessing: weights -> bf16 (MXU-native), biases -> f32. Hoisted out of the
    per-call path so every forward does not pay an extra HBM pass over the weights."""
    return {
        "w1": params["w1"].astype(jnp.bfloat16),
        "w2": params["w2"].astype(jnp.bfloat16),
        "w3": params["w3"].astype(jnp.bfloat16),
        "b1": params["b1"].astype(jnp.float32),
        "b2": params["b2"].astype(jnp.float32),
        "b3": params["b3"].astype(jnp.float32),
    }


def _choose_tile(B, K, h1, h2, enc_dim, vmem_cap, max_tb):
    # Aim for >=2 grid steps when the batch is big enough (v7x megacore), otherwise one tile.
    if B >= 16:
        tb = min(max_tb, _round_up(-(-B // 2), 8))
    else:
        tb = _round_up(B, 8)
    tb = max(8, _round_up(tb, 8))
    # Per-row VMEM footprint: x f32 double-buffer + out f32 double-buffer + f32 intermediates.
    per_row = 2 * K * 4 + 2 * enc_dim * 4 + (h1 + h2 + enc_dim) * 4
    budget = vmem_cap // 3
    while tb > 8 and tb * per_row > budget:
        tb = max(8, _round_up(tb // 2, 8))
    return tb


def linear_encoder_forward(x, prepared, *, max_tb=2048):
    """x: (B, input_dim) float32. prepared: output of prepare_params (weights (in,out) bf16)."""
    B, K = x.shape
    w1, w2, w3 = prepared["w1"], prepared["w2"], prepared["w3"]
    b1, b2, b3 = prepared["b1"], prepared["b2"], prepared["b3"]
    h1_dim, h2_dim, enc_dim = w1.shape[1], w2.shape[1], w3.shape[1]

    vmem_cap = _vmem_capacity_bytes()
    tb = _choose_tile(B, K, h1_dim, h2_dim, enc_dim, vmem_cap, max_tb)

    # Pad the batch only when ragged w.r.t. the tile (f32 pad, no extra cast pass).
    b_pad = _round_up(B, tb)
    x_in = x if b_pad == B else jnp.pad(x, ((0, b_pad - B), (0, 0)))
    grid = (b_pad // tb,)

    # VMEM estimate: double-buffered x/out, resident (double-buffered) weights/biases, intermediates.
    est = (2 * tb * K * 4
           + 2 * tb * enc_dim * 4
           + 2 * (K * h1_dim + h1_dim * h2_dim + h2_dim * enc_dim) * 2
           + 2 * (h1_dim + h2_dim + enc_dim) * 4
           + tb * (h1_dim + h2_dim + enc_dim) * 4)
    vmem_limit = max(4 * 1024 * 1024, min(2 * est + (1 << 20), int(0.75 * vmem_cap)))

    resident = lambda a: pl.BlockSpec(a.shape, lambda i: (0, 0))

    out = pl.pallas_call(
        _mlp_kernel,
        out_shape=jax.ShapeDtypeStruct((b_pad, enc_dim), jnp.float32),
        grid=grid,
        in_specs=[
            pl.BlockSpec((tb, K), lambda i: (i, 0)),   # x: tiled over batch
            resident(w1), resident(b1),
            resident(w2), resident(b2),
            resident(w3), resident(b3),
        ],
        out_specs=pl.BlockSpec((tb, enc_dim), lambda i: (i, 0)),  # unpadded, enc_dim == full dim
        compiler_params=pltpu.CompilerParams(
            dimension_semantics=("parallel",),
            vmem_limit_bytes=int(vmem_limit),
        ),
    )(x_in, w1, b1, w2, b2, w3, b3)

    return out if b_pad == B else out[:B]


def init_params(key, input_dim, encoding_dim):
    """Deterministic init mimicking PyTorch's default Linear init (uniform +-1/sqrt(fan_in))."""
    dims = [(input_dim, 128), (128, 64), (64, encoding_dim)]
    params = {}
    keys = jax.random.split(key, 2 * len(dims))
    for i, (fan_in, fan_out) in enumerate(dims):
        bound = 1.0 / jnp.sqrt(fan_in)
        w = jax.random.uniform(keys[2 * i], (fan_in, fan_out),
                               minval=-bound, maxval=bound, dtype=jnp.float32)
        b = jax.random.uniform(keys[2 * i + 1], (1, fan_out),
                               minval=-bound, maxval=bound, dtype=jnp.float32)
        params[f"w{i+1}"] = w
        params[f"b{i+1}"] = b
    return params


def _reference_bf16(x, p):
    """Reference following the kernel's bf16-operand / f32-accumulate pipeline."""
    xb = x.astype(jnp.bfloat16)
    w1 = p["w1"].astype(jnp.bfloat16)
    w2 = p["w2"].astype(jnp.bfloat16)
    w3 = p["w3"].astype(jnp.bfloat16)
    h = jnp.maximum(jnp.dot(xb, w1, preferred_element_type=jnp.float32) + p["b1"], 0.0)
    h = h.astype(jnp.bfloat16)
    h = jnp.maximum(jnp.dot(h, w2, preferred_element_type=jnp.float32) + p["b2"], 0.0)
    h = h.astype(jnp.bfloat16)
    h = jnp.maximum(jnp.dot(h, w3, preferred_element_type=jnp.float32) + p["b3"], 0.0)
    return h


def _reference_fp32(x, p):
    h = jnp.maximum(x @ p["w1"] + p["b1"], 0.0)
    h = jnp.maximum(h @ p["w2"] + p["b2"], 0.0)
    h = jnp.maximum(h @ p["w3"] + p["b3"], 0.0)
    return h


if __name__ == "__main__":
    B, input_dim, encoding_dim = 8, 32, 16

    key = jax.random.PRNGKey(0)
    kx, kp = jax.random.split(key)
    x = jax.random.normal(kx, (B, input_dim), dtype=jnp.float32)
    params = init_params(kp, input_dim, encoding_dim)
    prepared = prepare_params(params)   # one-time weight preprocessing (hoisted)

    out = linear_encoder_forward(x, prepared)
    out = jax.block_until_ready(out)

    assert out.shape == (B, encoding_dim)
    assert out.dtype == jnp.float32

    # Tight check vs a reference following the same bf16-operand pipeline.
    ref_bf16 = _reference_bf16(x, params)
    assert jnp.allclose(out, ref_bf16, atol=2e-3, rtol=2e-3), "mismatch vs bf16 reference"

    # Loose check vs the pure-fp32 PyTorch-equivalent reference (bf16 quantization error only).
    ref_f32 = _reference_fp32(x, params)
    assert jnp.allclose(out, ref_f32, atol=5e-2, rtol=5e-2), "mismatch vs fp32 reference"

    print("KERNEL_OK")
</pallas_src>

<mosaic_0001>
module attributes {stable_mosaic.version = 11 : i64} {
  func.func @_mlp_kernel(%arg0: i32, %arg1: memref<8x32xf32, #tpu.memory_space<vmem>>, %arg2: memref<32x128xbf16, #tpu.memory_space<vmem>>, %arg3: memref<1x128xf32, #tpu.memory_space<vmem>>, %arg4: memref<128x64xbf16, #tpu.memory_space<vmem>>, %arg5: memref<1x64xf32, #tpu.memory_space<vmem>>, %arg6: memref<64x16xbf16, #tpu.memory_space<vmem>>, %arg7: memref<1x16xf32, #tpu.memory_space<vmem>>, %arg8: memref<8x16xf32, #tpu.memory_space<vmem>>) attributes {dimension_semantics = [#tpu.dimension_semantics<parallel>], iteration_bounds = array<i64: 1>, scalar_prefetch = 0 : i64, scratch_operands = 0 : i64, tpu.core_type = #tpu.core_type<tc>, window_params = [{transform_indices = @transform_0, window_bounds = array<i64: 8, 32>}, {pipeline_mode = #tpu.pipeline_mode<synchronous>, transform_indices = @transform_1, window_bounds = array<i64: 32, 128>}, {pipeline_mode = #tpu.pipeline_mode<synchronous>, transform_indices = @transform_2, window_bounds = array<i64: 1, 128>}, {pipeline_mode = #tpu.pipeline_mode<synchronous>, transform_indices = @transform_3, window_bounds = array<i64: 128, 64>}, {pipeline_mode = #tpu.pipeline_mode<synchronous>, transform_indices = @transform_4, window_bounds = array<i64: 1, 64>}, {pipeline_mode = #tpu.pipeline_mode<synchronous>, transform_indices = @transform_5, window_bounds = array<i64: 64, 16>}, {pipeline_mode = #tpu.pipeline_mode<synchronous>, transform_indices = @transform_6, window_bounds = array<i64: 1, 16>}, {transform_indices = @transform_7, window_bounds = array<i64: 8, 16>}]} {
    %c0 = arith.constant 0 : index
    %c0_0 = arith.constant 0 : index
    %0 = vector.load %arg1[%c0, %c0_0] : memref<8x32xf32, #tpu.memory_space<vmem>>, vector<8x32xf32>
    %1 = arith.truncf %0 : vector<8x32xf32> to vector<8x32xbf16>
    %c0_1 = arith.constant 0 : index
    %c0_2 = arith.constant 0 : index
    %2 = vector.load %arg2[%c0_1, %c0_2] : memref<32x128xbf16, #tpu.memory_space<vmem>>, vector<32x128xbf16>
    %cst = arith.constant dense<0.000000e+00> : vector<8x128xf32>
    %3 = tpu.matmul %1, %2, %cst {dimension_numbers = #tpu.dot_dimension_numbers<[1], [0], [0], [1], [0, 0, 1, 1], [], []>} : vector<8x32xbf16>, vector<32x128xbf16>, vector<8x128xf32> -> vector<8x128xf32>
    %c0_3 = arith.constant 0 : index
    %c0_4 = arith.constant 0 : index
    %4 = vector.load %arg3[%c0_3, %c0_4] : memref<1x128xf32, #tpu.memory_space<vmem>>, vector<1x128xf32>
    %5 = vector.broadcast %4 : vector<1x128xf32> to vector<8x128xf32>
    %6 = arith.addf %3, %5 : vector<8x128xf32>
    %cst_5 = arith.constant 0.000000e+00 : f32
    %7 = vector.broadcast %cst_5 : f32 to vector<8x128xf32>
    %8 = arith.maximumf %6, %7 : vector<8x128xf32>
    %9 = arith.truncf %8 : vector<8x128xf32> to vector<8x128xbf16>
    %c0_6 = arith.constant 0 : index
    %c0_7 = arith.constant 0 : index
    %10 = vector.load %arg4[%c0_6, %c0_7] : memref<128x64xbf16, #tpu.memory_space<vmem>>, vector<128x64xbf16>
    %cst_8 = arith.constant dense<0.000000e+00> : vector<8x64xf32>
    %11 = tpu.matmul %9, %10, %cst_8 {dimension_numbers = #tpu.dot_dimension_numbers<[1], [0], [0], [1], [0, 0, 1, 1], [], []>} : vector<8x128xbf16>, vector<128x64xbf16>, vector<8x64xf32> -> vector<8x64xf32>
    %c0_9 = arith.constant 0 : index
    %c0_10 = arith.constant 0 : index
    %12 = vector.load %arg5[%c0_9, %c0_10] : memref<1x64xf32, #tpu.memory_space<vmem>>, vector<1x64xf32>
    %13 = vector.broadcast %12 : vector<1x64xf32> to vector<8x64xf32>
    %14 = arith.addf %11, %13 : vector<8x64xf32>
    %cst_11 = arith.constant 0.000000e+00 : f32
    %15 = vector.broadcast %cst_11 : f32 to vector<8x64xf32>
    %16 = arith.maximumf %14, %15 : vector<8x64xf32>
    %17 = arith.truncf %16 : vector<8x64xf32> to vector<8x64xbf16>
    %c0_12 = arith.constant 0 : index
    %c0_13 = arith.constant 0 : index
    %18 = vector.load %arg6[%c0_12, %c0_13] : memref<64x16xbf16, #tpu.memory_space<vmem>>, vector<64x16xbf16>
    %cst_14 = arith.constant dense<0.000000e+00> : vector<8x16xf32>
    %19 = tpu.matmul %17, %18, %cst_14 {dimension_numbers = #tpu.dot_dimension_numbers<[1], [0], [0], [1], [0, 0, 1, 1], [], []>} : vector<8x64xbf16>, vector<64x16xbf16>, vector<8x16xf32> -> vector<8x16xf32>
    %c0_15 = arith.constant 0 : index
    %c0_16 = arith.constant 0 : index
    %20 = vector.load %arg7[%c0_15, %c0_16] : memref<1x16xf32, #tpu.memory_space<vmem>>, vector<1x16xf32>
    %21 = vector.broadcast %20 : vector<1x16xf32> to vector<8x16xf32>
    %22 = arith.addf %19, %21 : vector<8x16xf32>
    %cst_17 = arith.constant 0.000000e+00 : f32
    %23 = vector.broadcast %cst_17 : f32 to vector<8x16xf32>
    %24 = arith.maximumf %22, %23 : vector<8x16xf32>
    %c0_18 = arith.constant 0 : index
    %c0_19 = arith.constant 0 : index
    %25 = vector.load %arg8[%c0_18, %c0_19] : memref<8x16xf32, #tpu.memory_space<vmem>>, vector<8x16xf32>
    tpu.vector_store %arg8[%c0_18, %c0_19], %24 {strides = array<i32>} : memref<8x16xf32, #tpu.memory_space<vmem>>, vector<8x16xf32>,
    return
  }
  func.func @transform_0(%arg0: i32) -> (i32, i32) {
    %c0_i32 = arith.constant 0 : i32
    %c0_i32_0 = arith.constant 0 : i32
    return %arg0, %c0_i32 : i32, i32
  }
  func.func @transform_1(%arg0: i32) -> (i32, i32) {
    %c0_i32 = arith.constant 0 : i32
    %c0_i32_0 = arith.constant 0 : i32
    %c0_i32_1 = arith.constant 0 : i32
    return %c0_i32, %c0_i32_0 : i32, i32
  }
  func.func @transform_2(%arg0: i32) -> (i32, i32) {
    %c0_i32 = arith.constant 0 : i32
    %c0_i32_0 = arith.constant 0 : i32
    %c0_i32_1 = arith.constant 0 : i32
    return %c0_i32, %c0_i32_0 : i32, i32
  }
  func.func @transform_3(%arg0: i32) -> (i32, i32) {
    %c0_i32 = arith.constant 0 : i32
    %c0_i32_0 = arith.constant 0 : i32
    %c0_i32_1 = arith.constant 0 : i32
    return %c0_i32, %c0_i32_0 : i32, i32
  }
  func.func @transform_4(%arg0: i32) -> (i32, i32) {
    %c0_i32 = arith.constant 0 : i32
    %c0_i32_0 = arith.constant 0 : i32
    %c0_i32_1 = arith.constant 0 : i32
    return %c0_i32, %c0_i32_0 : i32, i32
  }
  func.func @transform_5(%arg0: i32) -> (i32, i32) {
    %c0_i32 = arith.constant 0 : i32
    %c0_i32_0 = arith.constant 0 : i32
    %c0_i32_1 = arith.constant 0 : i32
    return %c0_i32, %c0_i32_0 : i32, i32
  }
  func.func @transform_6(%arg0: i32) -> (i32, i32) {
    %c0_i32 = arith.constant 0 : i32
    %c0_i32_0 = arith.constant 0 : i32
    %c0_i32_1 = arith.constant 0 : i32
    return %c0_i32, %c0_i32_0 : i32, i32
  }
  func.func @transform_7(%arg0: i32) -> (i32, i32) {
    %c0_i32 = arith.constant 0 : i32
    %c0_i32_0 = arith.constant 0 : i32
    return %arg0, %c0_i32 : i32, i32
  }
}

</mosaic_0001>

<llo_original>
// kernel: tpu_custom_call.1
$region0: #{tpu_custom_call.1}
  #allocation0 [shape = 'u32[]', space=smem, size = 0x4, offset = 0x4, fixed_abs, tag = 'smem constant byte address 0x4 - core index']
  #allocation1 [shape = 'u32[72,128]{1,0:T(1,128)}', space=vmem, size = 0x9000, scoped, tag = 'internal scratch']
  %s0 = inlined_call_operand.vmem [shape: f32[8,32], index: 0, kind: input, shape index: {}]
  %s1 = inlined_call_operand.vmem [shape: bf16[32,128], index: 1, kind: input, shape index: {}]
  %s2 = inlined_call_operand.vmem [shape: f32[1,128], index: 2, kind: input, shape index: {}]
  %s3 = inlined_call_operand.vmem [shape: bf16[128,64], index: 3, kind: input, shape index: {}]
  %s4 = inlined_call_operand.vmem [shape: f32[1,64], index: 4, kind: input, shape index: {}]
  %s5 = inlined_call_operand.vmem [shape: bf16[64,16], index: 5, kind: input, shape index: {}]
  %s6 = inlined_call_operand.vmem [shape: f32[1,16], index: 6, kind: input, shape index: {}]
  %s7 = inlined_call_operand.hbm [shape: f32[8,16], index: 7, kind: output, shape index: {}]
  %s8 = sld [smem:[#allocation0]]
  $region38: #{tpu_custom_call.1} parent=0
    _
  %s10 = ssub.s32 1, %s8
  %s11 = scalar_select 0, %s10, %s8
  $region1: #{tpu_custom_call.1} parent=0
    #allocation2 [shape = 'u8[4096]{0}', space=vmem, size = 0x1000, scoped, tag = 'output window, operand 0, single buffered']
    #allocation3 [shape = 's32[1]{0}', space=sflag, size = 0x4, scoped, tag = 'scoped memory for tpu_custom_call.1']
    %12 = vsyncpa [#allocation3], 0
    // Predicated region
    $region2: #{tpu_custom_call.1} parent=1 // pred_check
      _
    $region3: #{tpu_custom_call.1} parent=1 // pred_check_branch
      %14 = sbr.rel (0) target = $region5
    $region4: #{tpu_custom_call.1} parent=1 // pred_region
      _
    $region5: #{tpu_custom_call.1} parent=1 // pred_fallthru
      _
    // Predicated region
    $region6: #{tpu_custom_call.1} parent=1 // pred_check
      _
    $region7: #{tpu_custom_call.1} parent=1 // pred_check_branch
      %16 = sbr.rel (0) target = $region9
    $region8: #{tpu_custom_call.1} parent=1 // pred_region
      _
    $region9: #{tpu_custom_call.1} parent=1 // pred_fallthru
      _
    // Predicated region
    $region10: #{tpu_custom_call.1} parent=1 // pred_check
      _
    $region11: #{tpu_custom_call.1} parent=1 // pred_check_branch
      %18 = sbr.rel (0) target = $region13
    $region12: #{tpu_custom_call.1} parent=1 // pred_region
      _
    $region13: #{tpu_custom_call.1} parent=1 // pred_fallthru
      _
    // Predicated region
    $region14: #{tpu_custom_call.1} parent=1 // pred_check
      _
    $region15: #{tpu_custom_call.1} parent=1 // pred_check_branch
      %20 = sbr.rel (0) target = $region17
    $region16: #{tpu_custom_call.1} parent=1 // pred_region
      _
    $region17: #{tpu_custom_call.1} parent=1 // pred_fallthru
      _
    // Predicated region
    $region18: #{tpu_custom_call.1} parent=1 // pred_check
      _
    $region19: #{tpu_custom_call.1} parent=1 // pred_check_branch
      %22 = sbr.rel (0) target = $region21
    $region20: #{tpu_custom_call.1} parent=1 // pred_region
      _
    $region21: #{tpu_custom_call.1} parent=1 // pred_fallthru
      _
    // Predicated region
    $region22: #{tpu_custom_call.1} parent=1 // pred_check
      _
    $region23: #{tpu_custom_call.1} parent=1 // pred_check_branch
      %24 = sbr.rel (0) target = $region25
    $region24: #{tpu_custom_call.1} parent=1 // pred_region
      _
    $region25: #{tpu_custom_call.1} parent=1 // pred_fallthru
      _
    // Predicated region
    $region26: #{tpu_custom_call.1} parent=1 // pred_check
      _
    $region27: #{tpu_custom_call.1} parent=1 // pred_check_branch
      %26 = sbr.rel (0) target = $region29
    $region28: #{tpu_custom_call.1} parent=1 // pred_region
      _
    $region29: #{tpu_custom_call.1} parent=1 // pred_fallthru
      _
    %v28 = vld [vmem:[%s0] sm:$0xff]
    %v29 = vpack.c.bf16 %v28, %v28
    %v30 = vld [vmem:[%s1] sm:$0xf]
    %v31 = vld [vmem:[%s1 + $0x4] sm:$0xf]
    %v32 = vld [vmem:[%s1 + $0x8] sm:$0xf]
    %v33 = vld [vmem:[%s1 + $0xc] sm:$0xf]
    %v34 = vld [vmem:[%s2] sm:$0x1]
    %v36 = vperm.slane %v34, 0
    %v42 = vunpack.c.l.b16 %v30
    %v43 = vunpack.c.l.b16 %v31
    %v44 = vunpack.c.l.b16 %v32
    %v45 = vunpack.c.l.b16 %v33
    %v46 = vpack.c.b16 %v43, %v42
    %v47 = vpack.c.b16 %v45, %v44
    %vm50 = vcmask 261120
    %v52 = vsel %vm50, %v29, 0
    %54 = vmatpush.bf16.msra.mxu0 0
    %55 = vmatpush.bf16.msra.mxu0 0
    %56 = vmatpush.bf16.msra.mxu0 0
    %57 = vmatpush.bf16.msra.mxu0 0
    %58 = vmatpush.bf16.msra.mxu0 0
    %59 = vmatpush.bf16.msra.mxu0 0
    %60 = vmatpush.bf16.msra.mxu0 %v47
    %61 = vmatpush.bf16.msra.mxu0 %v46
    %62 = vmatmul.bf16.gmra.mxu0 %v52
    %v63 = vpop.f32.mrf.mxu0
    %v64 = vadd.f32 %v36, %v63
    %v65 = vpop.f32.mrf.mxu0
    %66 = vdwg.mxu0
    %v67 = vmax.f32 %v64, 0.0
    %v68 = vpack.c.bf16 %v67, %v67
    %v69 = vld [vmem:[%s3] sm:$0xf]
    %v70 = vld [vmem:[%s3 + $0x4] sm:$0xf]
    %v71 = vld [vmem:[%s3 + $0x8] sm:$0xf]
    %v72 = vld [vmem:[%s3 + $0xc] sm:$0xf]
    %v73 = vld [vmem:[%s3 + $0x10] sm:$0xf]
    %v74 = vld [vmem:[%s3 + $0x14] sm:$0xf]
    %v75 = vld [vmem:[%s3 + $0x18] sm:$0xf]
    %v76 = vld [vmem:[%s3 + $0x1c] sm:$0xf]
    %v77 = vld [vmem:[%s3 + $0x20] sm:$0xf]
    %v78 = vld [vmem:[%s3 + $0x24] sm:$0xf]
    %v79 = vld [vmem:[%s3 + $0x28] sm:$0xf]
    %v80 = vld [vmem:[%s3 + $0x2c] sm:$0xf]
    %v81 = vld [vmem:[%s3 + $0x30] sm:$0xf]
    %v82 = vld [vmem:[%s3 + $0x34] sm:$0xf]
    %v83 = vld [vmem:[%s3 + $0x38] sm:$0xf]
    %v84 = vld [vmem:[%s3 + $0x3c] sm:$0xf]
    %v85 = vld [vmem:[%s4] sm:$0x1]
    %v87 = vperm.slane %v85, 0
    %v105 = vunpack.c.l.b16 %v69
    %v106 = vunpack.c.l.b16 %v70
    %v107 = vunpack.c.l.b16 %v71
    %v108 = vunpack.c.l.b16 %v72
    %v109 = vunpack.c.l.b16 %v73
    %v110 = vunpack.c.l.b16 %v74
    %v111 = vunpack.c.l.b16 %v75
    %v112 = vunpack.c.l.b16 %v76
    %v113 = vunpack.c.l.b16 %v77
    %v114 = vunpack.c.l.b16 %v78
    %v115 = vunpack.c.l.b16 %v79
    %v116 = vunpack.c.l.b16 %v80
    %v117 = vunpack.c.l.b16 %v81
    %v118 = vunpack.c.l.b16 %v82
    %v119 = vunpack.c.l.b16 %v83
    %v120 = vunpack.c.l.b16 %v84
    %v121 = vpack.c.b16 %v106, %v105
    %v122 = vpack.c.b16 %v108, %v107
    %v123 = vpack.c.b16 %v110, %v109
    %v124 = vpack.c.b16 %v112, %v111
    %v125 = vpack.c.b16 %v114, %v113
    %v126 = vpack.c.b16 %v116, %v115
    %v127 = vpack.c.b16 %v118, %v117
    %v128 = vpack.c.b16 %v120, %v119
    %137 = vmatpush.bf16.msra.mxu0 %v128
    %138 = vmatpush.bf16.msra.mxu0 %v127
    %139 = vmatpush.bf16.msra.mxu0 %v126
    %140 = vmatpush.bf16.msra.mxu0 %v125
    %141 = vmatpush.bf16.msra.mxu0 %v124
    %142 = vmatpush.bf16.msra.mxu0 %v123
    %143 = vmatpush.bf16.msra.mxu0 %v122
    %144 = vmatpush.bf16.msra.mxu0 %v121
    %145 = vmatmul.bf16.gmra.mxu0 %v68
    %v146 = vpop.f32.mrf.mxu0
    %v147 = vadd.f32 %v87, %v146
    %v148 = vpop.f32.mrf.mxu0
    %149 = vdwg.mxu0
    %v150 = vmax.f32 %v147, 0.0
    %v151 = vpack.c.bf16 %v150, %v150
    %v152 = vld [vmem:[%s5] sm:$0xf]
    %v153 = vld [vmem:[%s5 + $0x4] sm:$0xf]
    %v154 = vld [vmem:[%s5 + $0x8] sm:$0xf]
    %v155 = vld [vmem:[%s5 + $0xc] sm:$0xf]
    %v156 = vld [vmem:[%s5 + $0x10] sm:$0xf]
    %v157 = vld [vmem:[%s5 + $0x14] sm:$0xf]
    %v158 = vld [vmem:[%s5 + $0x18] sm:$0xf]
    %v159 = vld [vmem:[%s5 + $0x1c] sm:$0xf]
    %v160 = vld [vmem:[%s6] sm:$0x1]
    %v162 = vperm.slane %v160, 0
    %v172 = vunpack.c.l.b16 %v152
    %v173 = vunpack.c.l.b16 %v153
    %v174 = vunpack.c.l.b16 %v154
    %v175 = vunpack.c.l.b16 %v155
    %v176 = vunpack.c.l.b16 %v156
    %v177 = vunpack.c.l.b16 %v157
    %v178 = vunpack.c.l.b16 %v158
    %v179 = vunpack.c.l.b16 %v159
    %v180 = vpack.c.b16 %v173, %v172
    %v181 = vpack.c.b16 %v175, %v174
    %v182 = vpack.c.b16 %v177, %v176
    %v183 = vpack.c.b16 %v179, %v178
    %vm188 = vcmask 523264
    %v190 = vsel %vm188, %v151, 0
    %192 = vmatpush.bf16.msra.mxu0 0
    %193 = vmatpush.bf16.msra.mxu0 0
    %194 = vmatpush.bf16.msra.mxu0 0
    %195 = vmatpush.bf16.msra.mxu0 0
    %196 = vmatpush.bf16.msra.mxu0 %v183
    %197 = vmatpush.bf16.msra.mxu0 %v182
    %198 = vmatpush.bf16.msra.mxu0 %v181
    %199 = vmatpush.bf16.msra.mxu0 %v180
    %200 = vmatmul.bf16.gmra.mxu0 %v190
    %v201 = vpop.f32.mrf.mxu0
    %v202 = vadd.f32 %v162, %v201
    %v203 = vpop.f32.mrf.mxu0
    %204 = vdwg.mxu0
    %v205 = vmax.f32 %v202, 0.0
    %vm206 = vcmask 130048
    %207 = vst.msk [vmem:[#allocation2] sm:$0xff] %vm206, %v205
    // Predicated region
    $region30: #{tpu_custom_call.1} parent=1 // pred_check
      _
    $region31: #{tpu_custom_call.1} parent=1 // pred_check_branch
      %209 = sbr.rel (0) target = $region33
    $region32: #{tpu_custom_call.1} parent=1 // pred_region
      %211 = vsyncadd [#allocation3], 0
      %s213 = sshll.u32 [#allocation2], 4
      %s214 = int_to_ptr.vmem [resolvable:$true] %s213
      %s215 = sshll.u32 %s7, 4
      %s216 = int_to_ptr.hbm [resolvable:$true] %s215
      %218 = dma.vmem_to_hbm [thread:$0]  %s214, 128, %s216, [#allocation3]
    $region33: #{tpu_custom_call.1} parent=1 // pred_fallthru
      _
    // Predicated region
    $region34: #{tpu_custom_call.1} parent=1 // pred_check
      _
    $region35: #{tpu_custom_call.1} parent=1 // pred_check_branch
      %220 = sbr.rel (0) target = $region37
    $region36: #{tpu_custom_call.1} parent=1 // pred_region
      %222 = dma.done [#allocation3], 128
    $region37: #{tpu_custom_call.1} parent=1 // pred_fallthru
      _
    %223 = vsyncpa [#allocation3], 1

</llo_original>
